<compile_context>
chip_gen: v7x
topology: tpu7x:2x2x1
jax: 0.10.0
libtpu: 0.0.40
codegen_flags: <defaults>
</compile_context>

<pallas_src>
import jax
import jax.numpy as jnp
from jax.experimental import pallas as pl
from jax.experimental.pallas import tpu as pltpu

_NEG = -1.0e30  # mask value for padded logit lanes (exp() underflows to 0)


def _round_up(n, m):
    return (n + m - 1) // m * m


def _mlp_kernel(x_ref, w1_ref, w2_ref, w3_ref, w4_ref, o_ref):
    wdt = w1_ref.dtype
    # Biases are folded into the weight matrices (ones-lane trick), so each
    # layer is a single MXU dot; accumulate in f32, epilogue stays f32.
    h = jnp.dot(x_ref[...], w1_ref[...], preferred_element_type=jnp.float32)
    h = jnp.maximum(h, 0.0)
    h = jnp.dot(h.astype(wdt), w2_ref[...], preferred_element_type=jnp.float32)
    h = jnp.maximum(h, 0.0)
    h = jnp.dot(h.astype(wdt), w3_ref[...], preferred_element_type=jnp.float32)
    h = jnp.maximum(h, 0.0)
    logits = jnp.dot(h.astype(wdt), w4_ref[...],
                     preferred_element_type=jnp.float32)
    # Numerically stable log-softmax over the lane axis.  Padded lanes hold
    # -1e30 so they never win the max and contribute 0 to the sum.
    m = jnp.max(logits, axis=1, keepdims=True)
    shifted = logits - m
    lse = jnp.log(jnp.sum(jnp.exp(shifted), axis=1, keepdims=True))
    o_ref[...] = (shifted - lse).astype(o_ref.dtype)


def init_params(key, input_dim, output_dim, hidden1=16, hidden2=16, hidden3=16):
    """PyTorch-Linear-style init (uniform +/- 1/sqrt(fan_in)), stored (D_in, D_out)."""
    dims = [(input_dim, hidden1), (hidden1, hidden2),
            (hidden2, hidden3), (hidden3, output_dim)]
    params = {}
    for i, (fan_in, fan_out) in enumerate(dims, start=1):
        key, kw, kb = jax.random.split(key, 3)
        bound = 1.0 / jnp.sqrt(fan_in)
        params[f"w{i}"] = jax.random.uniform(
            kw, (fan_in, fan_out), jnp.float32, -bound, bound)
        params[f"b{i}"] = jax.random.uniform(
            kb, (1, fan_out), jnp.float32, -bound, bound)
    return params


def pack_params(params, dtype=jnp.float32):
    """Pad weights to 128-lane MXU tiles and fold biases in via a ones lane.

    For layer l with weight (K, N) and bias (N,):
      packed[:K, :N]   = W
      packed[K,  :N]   = b            (consumed by the ones lane of the input)
      packed[K,  N]    = 1.0          (emits the ones lane for the next layer)
    For fc4 the padded output lanes get -1e30 instead, masking the log-softmax.
    """
    w1, w2, w3, w4 = params["w1"], params["w2"], params["w3"], params["w4"]
    b1, b2, b3, b4 = (params[f"b{i}"].reshape(-1) for i in range(1, 5))
    d_in, h1 = w1.shape
    h2, h3, d_out = w2.shape[1], w3.shape[1], w4.shape[1]
    KP = _round_up(d_in + 1, 128)
    H1 = _round_up(h1 + 1, 128)
    H2 = _round_up(h2 + 1, 128)
    H3 = _round_up(h3 + 1, 128)
    OP = _round_up(d_out, 128)

    def pack_hidden(w, b, rows, cols, k, n):
        m = jnp.zeros((rows, cols), jnp.float32)
        m = m.at[:k, :n].set(w)
        m = m.at[k, :n].set(b)
        m = m.at[k, n].set(1.0)      # propagate the ones lane
        return m.astype(dtype)

    w1p = pack_hidden(w1, b1, KP, H1, d_in, h1)
    w2p = pack_hidden(w2, b2, H1, H2, h1, h2)
    w3p = pack_hidden(w3, b3, H2, H3, h2, h3)

    w4p = jnp.zeros((H3, OP), jnp.float32)
    w4p = w4p.at[:h3, :d_out].set(w4)
    w4p = w4p.at[h3, :d_out].set(b4)
    w4p = w4p.at[h3, d_out:].set(_NEG)   # mask padded logit lanes
    w4p = w4p.astype(dtype)

    return {"w1p": w1p, "w2p": w2p, "w3p": w3p, "w4p": w4p,
            "d_in": d_in, "d_out": d_out, "KP": KP, "OP": OP}


def model1_forward(x, packed, *, block_b=256):
    """x: (B, input_dim) float32 -> (B, output_dim) float32 log-probabilities."""
    B, D = x.shape
    assert D == packed["d_in"]
    KP, OP, d_out = packed["KP"], packed["OP"], packed["d_out"]
    dtype = packed["w1p"].dtype

    TB = min(block_b, _round_up(B, 8))      # batch tile (multiple of 8 sublanes)
    B_pad = _round_up(B, TB)

    # Lane-padded input with a ones lane at column D (feeds the fc1 bias row).
    x_pad = jnp.zeros((B_pad, KP), dtype)
    x_pad = x_pad.at[:B, :D].set(x.astype(dtype))
    x_pad = x_pad.at[:, D].set(jnp.asarray(1.0, dtype))

    w1p, w2p, w3p, w4p = packed["w1p"], packed["w2p"], packed["w3p"], packed["w4p"]

    out = pl.pallas_call(
        _mlp_kernel,
        out_shape=jax.ShapeDtypeStruct((B_pad, OP), jnp.float32),
        grid=(B_pad // TB,),
        in_specs=[
            pl.BlockSpec((TB, KP), lambda i: (i, 0)),        # activations: pipelined
            pl.BlockSpec(w1p.shape, lambda i: (0, 0)),       # weights: resident
            pl.BlockSpec(w2p.shape, lambda i: (0, 0)),
            pl.BlockSpec(w3p.shape, lambda i: (0, 0)),
            pl.BlockSpec(w4p.shape, lambda i: (0, 0)),
        ],
        out_specs=pl.BlockSpec((TB, OP), lambda i: (i, 0)),  # lane-dense output
        compiler_params=pltpu.CompilerParams(
            dimension_semantics=("parallel",)),              # megacore on v7x
    )(x_pad, w1p, w2p, w3p, w4p)

    return out[:B, :d_out]


def _reference(x, p):
    h = jax.nn.relu(x @ p["w1"] + p["b1"])
    h = jax.nn.relu(h @ p["w2"] + p["b2"])
    h = jax.nn.relu(h @ p["w3"] + p["b3"])
    logits = h @ p["w4"] + p["b4"]
    return jax.nn.log_softmax(logits, axis=1)


if __name__ == "__main__":
    input_dim, output_dim = 32, 10
    key = jax.random.PRNGKey(0)
    key, kx1, kx2 = jax.random.split(key, 3)
    params = init_params(key, input_dim, output_dim)
    packed = pack_params(params)          # f32 MXU; use dtype=jnp.bfloat16 on v6e/v7x

    fwd = jax.jit(lambda xx: model1_forward(xx, packed))

    # Small case (single grid step).
    x_small = jax.random.normal(kx1, (8, input_dim), jnp.float32)
    out_small = jax.block_until_ready(fwd(x_small))
    ref_small = _reference(x_small, params)
    assert out_small.shape == (8, output_dim)
    assert jnp.allclose(out_small, ref_small, atol=2e-5, rtol=2e-5)

    # Ragged batch: exercises the batch grid (2 steps) + row padding path.
    x_big = jax.random.normal(kx2, (260, input_dim), jnp.float32)
    out_big = jax.block_until_ready(fwd(x_big))
    ref_big = _reference(x_big, params)
    assert out_big.shape == (260, output_dim)
    assert jnp.allclose(out_big, ref_big, atol=2e-5, rtol=2e-5)

    print("KERNEL_OK")
</pallas_src>

<mosaic_0001>
module attributes {stable_mosaic.version = 11 : i64} {
  func.func @_mlp_kernel(%arg0: i32, %arg1: memref<8x128xf32, #tpu.memory_space<vmem>>, %arg2: memref<128x128xf32, #tpu.memory_space<vmem>>, %arg3: memref<128x128xf32, #tpu.memory_space<vmem>>, %arg4: memref<128x128xf32, #tpu.memory_space<vmem>>, %arg5: memref<128x128xf32, #tpu.memory_space<vmem>>, %arg6: memref<8x128xf32, #tpu.memory_space<vmem>>) attributes {dimension_semantics = [#tpu.dimension_semantics<parallel>], iteration_bounds = array<i64: 1>, scalar_prefetch = 0 : i64, scratch_operands = 0 : i64, tpu.core_type = #tpu.core_type<tc>, window_params = [{transform_indices = @transform_0, window_bounds = array<i64: 8, 128>}, {pipeline_mode = #tpu.pipeline_mode<synchronous>, transform_indices = @transform_1, window_bounds = array<i64: 128, 128>}, {pipeline_mode = #tpu.pipeline_mode<synchronous>, transform_indices = @transform_2, window_bounds = array<i64: 128, 128>}, {pipeline_mode = #tpu.pipeline_mode<synchronous>, transform_indices = @transform_3, window_bounds = array<i64: 128, 128>}, {pipeline_mode = #tpu.pipeline_mode<synchronous>, transform_indices = @transform_4, window_bounds = array<i64: 128, 128>}, {transform_indices = @transform_5, window_bounds = array<i64: 8, 128>}]} {
    %c0 = arith.constant 0 : index
    %c0_0 = arith.constant 0 : index
    %0 = vector.load %arg1[%c0, %c0_0] : memref<8x128xf32, #tpu.memory_space<vmem>>, vector<8x128xf32>
    %c0_1 = arith.constant 0 : index
    %c0_2 = arith.constant 0 : index
    %1 = vector.load %arg2[%c0_1, %c0_2] : memref<128x128xf32, #tpu.memory_space<vmem>>, vector<128x128xf32>
    %cst = arith.constant dense<0.000000e+00> : vector<8x128xf32>
    %2 = tpu.matmul %0, %1, %cst {dimension_numbers = #tpu.dot_dimension_numbers<[1], [0], [0], [1], [0, 0, 1, 1], [], []>} : vector<8x128xf32>, vector<128x128xf32>, vector<8x128xf32> -> vector<8x128xf32>
    %cst_3 = arith.constant 0.000000e+00 : f32
    %3 = vector.broadcast %cst_3 : f32 to vector<8x128xf32>
    %4 = arith.maximumf %2, %3 : vector<8x128xf32>
    %c0_4 = arith.constant 0 : index
    %c0_5 = arith.constant 0 : index
    %5 = vector.load %arg3[%c0_4, %c0_5] : memref<128x128xf32, #tpu.memory_space<vmem>>, vector<128x128xf32>
    %cst_6 = arith.constant dense<0.000000e+00> : vector<8x128xf32>
    %6 = tpu.matmul %4, %5, %cst_6 {dimension_numbers = #tpu.dot_dimension_numbers<[1], [0], [0], [1], [0, 0, 1, 1], [], []>} : vector<8x128xf32>, vector<128x128xf32>, vector<8x128xf32> -> vector<8x128xf32>
    %cst_7 = arith.constant 0.000000e+00 : f32
    %7 = vector.broadcast %cst_7 : f32 to vector<8x128xf32>
    %8 = arith.maximumf %6, %7 : vector<8x128xf32>
    %c0_8 = arith.constant 0 : index
    %c0_9 = arith.constant 0 : index
    %9 = vector.load %arg4[%c0_8, %c0_9] : memref<128x128xf32, #tpu.memory_space<vmem>>, vector<128x128xf32>
    %cst_10 = arith.constant dense<0.000000e+00> : vector<8x128xf32>
    %10 = tpu.matmul %8, %9, %cst_10 {dimension_numbers = #tpu.dot_dimension_numbers<[1], [0], [0], [1], [0, 0, 1, 1], [], []>} : vector<8x128xf32>, vector<128x128xf32>, vector<8x128xf32> -> vector<8x128xf32>
    %cst_11 = arith.constant 0.000000e+00 : f32
    %11 = vector.broadcast %cst_11 : f32 to vector<8x128xf32>
    %12 = arith.maximumf %10, %11 : vector<8x128xf32>
    %c0_12 = arith.constant 0 : index
    %c0_13 = arith.constant 0 : index
    %13 = vector.load %arg5[%c0_12, %c0_13] : memref<128x128xf32, #tpu.memory_space<vmem>>, vector<128x128xf32>
    %cst_14 = arith.constant dense<0.000000e+00> : vector<8x128xf32>
    %14 = tpu.matmul %12, %13, %cst_14 {dimension_numbers = #tpu.dot_dimension_numbers<[1], [0], [0], [1], [0, 0, 1, 1], [], []>} : vector<8x128xf32>, vector<128x128xf32>, vector<8x128xf32> -> vector<8x128xf32>
    %cst_15 = arith.constant dense<0xFF800000> : vector<8xf32>
    %15 = vector.multi_reduction <maximumf>, %14, %cst_15 [1] : vector<8x128xf32> to vector<8xf32>
    %16 = vector.shape_cast %15 : vector<8xf32> to vector<8x1xf32>
    %17 = vector.broadcast %16 : vector<8x1xf32> to vector<8x128xf32>
    %18 = arith.subf %14, %17 : vector<8x128xf32>
    %19 = math.exp %18 : vector<8x128xf32>
    %cst_16 = arith.constant dense<0.000000e+00> : vector<8xf32>
    %20 = vector.multi_reduction <add>, %19, %cst_16 [1] : vector<8x128xf32> to vector<8xf32>
    %21 = vector.shape_cast %20 : vector<8xf32> to vector<8x1xf32>
    %22 = math.log %21 : vector<8x1xf32>
    %23 = vector.broadcast %22 : vector<8x1xf32> to vector<8x128xf32>
    %24 = arith.subf %18, %23 : vector<8x128xf32>
    %c0_17 = arith.constant 0 : index
    %c0_18 = arith.constant 0 : index
    %25 = vector.load %arg6[%c0_17, %c0_18] : memref<8x128xf32, #tpu.memory_space<vmem>>, vector<8x128xf32>
    tpu.vector_store %arg6[%c0_17, %c0_18], %24 {strides = array<i32>} : memref<8x128xf32, #tpu.memory_space<vmem>>, vector<8x128xf32>,
    return
  }
  func.func @transform_0(%arg0: i32) -> (i32, i32) {
    %c0_i32 = arith.constant 0 : i32
    %c0_i32_0 = arith.constant 0 : i32
    return %arg0, %c0_i32 : i32, i32
  }
  func.func @transform_1(%arg0: i32) -> (i32, i32) {
    %c0_i32 = arith.constant 0 : i32
    %c0_i32_0 = arith.constant 0 : i32
    %c0_i32_1 = arith.constant 0 : i32
    return %c0_i32, %c0_i32_0 : i32, i32
  }
  func.func @transform_2(%arg0: i32) -> (i32, i32) {
    %c0_i32 = arith.constant 0 : i32
    %c0_i32_0 = arith.constant 0 : i32
    %c0_i32_1 = arith.constant 0 : i32
    return %c0_i32, %c0_i32_0 : i32, i32
  }
  func.func @transform_3(%arg0: i32) -> (i32, i32) {
    %c0_i32 = arith.constant 0 : i32
    %c0_i32_0 = arith.constant 0 : i32
    %c0_i32_1 = arith.constant 0 : i32
    return %c0_i32, %c0_i32_0 : i32, i32
  }
  func.func @transform_4(%arg0: i32) -> (i32, i32) {
    %c0_i32 = arith.constant 0 : i32
    %c0_i32_0 = arith.constant 0 : i32
    %c0_i32_1 = arith.constant 0 : i32
    return %c0_i32, %c0_i32_0 : i32, i32
  }
  func.func @transform_5(%arg0: i32) -> (i32, i32) {
    %c0_i32 = arith.constant 0 : i32
    %c0_i32_0 = arith.constant 0 : i32
    return %arg0, %c0_i32 : i32, i32
  }
}

</mosaic_0001>

<llo_original>
// kernel: _lambda_.1
$region0: #{_lambda_.1}
  #allocation0 [shape = 'u32[]', space=smem, size = 0x4, offset = 0x4, fixed_abs, tag = 'smem constant byte address 0x4 - core index']
  #allocation1 [shape = 'u32[144,128]{1,0:T(1,128)}', space=vmem, size = 0x12000, scoped, tag = 'internal scratch']
  %s0 = inlined_call_operand.vmem [shape: f32[8,128], index: 0, kind: input, shape index: {}]
  %s1 = inlined_call_operand.hbm [shape: f32[128,128], index: 1, kind: input, shape index: {}]
  %s2 = inlined_call_operand.hbm [shape: f32[128,128], index: 2, kind: input, shape index: {}]
  %s3 = inlined_call_operand.hbm [shape: f32[128,128], index: 3, kind: input, shape index: {}]
  %s4 = inlined_call_operand.hbm [shape: f32[128,128], index: 4, kind: input, shape index: {}]
  %s5 = inlined_call_operand.hbm [shape: f32[8,128], index: 5, kind: output, shape index: {}]
  %s6 = sld [smem:[#allocation0]]
  $region46: #{_lambda_.1} parent=0
    _
  %s8 = ssub.s32 1, %s6
  %s9 = scalar_select 0, %s8, %s6
  $region1: #{_lambda_.1} parent=0
    #allocation2 [shape = 'u8[65536]{0}', space=vmem, size = 0x10000, scoped, tag = 'input window, operand 1, single buffered']
    #allocation3 [shape = 's32[1]{0}', space=sflag, size = 0x4, scoped, tag = 'scoped memory for _lambda_.1']
    #allocation4 [shape = 's32[1]{0}', space=sflag, size = 0x4, scoped, tag = 'scoped memory for _lambda_.1']
    #allocation5 [shape = 'u8[65536]{0}', space=vmem, size = 0x10000, scoped, tag = 'input window, operand 2, single buffered']
    #allocation6 [shape = 's32[1]{0}', space=sflag, size = 0x4, scoped, tag = 'scoped memory for _lambda_.1']
    #allocation7 [shape = 'u8[65536]{0}', space=vmem, size = 0x10000, scoped, tag = 'input window, operand 3, single buffered']
    #allocation8 [shape = 'u8[65536]{0}', space=vmem, size = 0x10000, scoped, tag = 'input window, operand 4, single buffered']
    #allocation9 [shape = 's32[1]{0}', space=sflag, size = 0x4, scoped, tag = 'scoped memory for _lambda_.1']
    #allocation10 [shape = 'u8[4096]{0}', space=vmem, size = 0x1000, scoped, tag = 'output window, operand 0, single buffered']
    %10 = vsyncpa [#allocation3], 0
    %11 = vsyncpa [#allocation6], 0
    %12 = vsyncpa [#allocation9], 0
    %13 = vsyncpa [#allocation4], 0
    // Predicated region
    $region2: #{_lambda_.1} parent=1 // pred_check
      _
    $region3: #{_lambda_.1} parent=1 // pred_check_branch
      %15 = sbr.rel (0) target = $region5
    $region4: #{_lambda_.1} parent=1 // pred_region
      _
    $region5: #{_lambda_.1} parent=1 // pred_fallthru
      _
    // Predicated region
    $region6: #{_lambda_.1} parent=1 // pred_check
      _
    $region7: #{_lambda_.1} parent=1 // pred_check_branch
      %17 = sbr.rel (0) target = $region9
    $region8: #{_lambda_.1} parent=1 // pred_region
      %s19 = ssub.s32 2048, 2048
      %20 = vsyncadd [#allocation3], %s19
      %s21 = sshll.u32 [#allocation2], 4
      %s22 = int_to_ptr.vmem [resolvable:$true] %s21
      %27 = dma.hbm_to_vmem [thread:$0]  %s1, 2048, %s22, [#allocation3], 128, 128, 8
    $region9: #{_lambda_.1} parent=1 // pred_fallthru
      _
    // Predicated region
    $region10: #{_lambda_.1} parent=1 // pred_check
      _
    $region11: #{_lambda_.1} parent=1 // pred_check_branch
      %29 = sbr.rel (0) target = $region13
    $region12: #{_lambda_.1} parent=1 // pred_region
      %s31 = ssub.s32 2048, 2048
      %32 = vsyncadd [#allocation6], %s31
      %s33 = sshll.u32 [#allocation5], 4
      %s34 = int_to_ptr.vmem [resolvable:$true] %s33
      %39 = dma.hbm_to_vmem [thread:$0]  %s2, 2048, %s34, [#allocation6], 128, 128, 8
    $region13: #{_lambda_.1} parent=1 // pred_fallthru
      _
    // Predicated region
    $region14: #{_lambda_.1} parent=1 // pred_check
      _
    $region15: #{_lambda_.1} parent=1 // pred_check_branch
      %41 = sbr.rel (0) target = $region17
    $region16: #{_lambda_.1} parent=1 // pred_region
      %s43 = ssub.s32 2048, 2048
      %44 = vsyncadd [#allocation6], %s43
      %s45 = sshll.u32 [#allocation7], 4
      %s46 = int_to_ptr.vmem [resolvable:$true] %s45
      %51 = dma.hbm_to_vmem [thread:$0]  %s3, 2048, %s46, [#allocation6], 128, 128, 8
    $region17: #{_lambda_.1} parent=1 // pred_fallthru
      _
    // Predicated region
    $region18: #{_lambda_.1} parent=1 // pred_check
      _
    $region19: #{_lambda_.1} parent=1 // pred_check_branch
      %53 = sbr.rel (0) target = $region21
    $region20: #{_lambda_.1} parent=1 // pred_region
      %s55 = ssub.s32 2048, 2048
      %56 = vsyncadd [#allocation9], %s55
      %s57 = sshll.u32 [#allocation8], 4
      %s58 = int_to_ptr.vmem [resolvable:$true] %s57
      %63 = dma.hbm_to_vmem [thread:$0]  %s4, 2048, %s58, [#allocation9], 128, 128, 8
    $region21: #{_lambda_.1} parent=1 // pred_fallthru
      _
    // Predicated region
    $region22: #{_lambda_.1} parent=1 // pred_check
      _
    $region23: #{_lambda_.1} parent=1 // pred_check_branch
      %65 = sbr.rel (0) target = $region25
    $region24: #{_lambda_.1} parent=1 // pred_region
      %66 = dma.done [#allocation3], 2048
    $region25: #{_lambda_.1} parent=1 // pred_fallthru
      _
    // Predicated region
    $region26: #{_lambda_.1} parent=1 // pred_check
      _
    $region27: #{_lambda_.1} parent=1 // pred_check_branch
      %68 = sbr.rel (0) target = $region29
    $region28: #{_lambda_.1} parent=1 // pred_region
      %69 = dma.done [#allocation6], 2048
    $region29: #{_lambda_.1} parent=1 // pred_fallthru
      _
    // Predicated region
    $region30: #{_lambda_.1} parent=1 // pred_check
      _
    $region31: #{_lambda_.1} parent=1 // pred_check_branch
      %71 = sbr.rel (0) target = $region33
    $region32: #{_lambda_.1} parent=1 // pred_region
      %72 = dma.done [#allocation6], 2048
    $region33: #{_lambda_.1} parent=1 // pred_fallthru
      _
    // Predicated region
    $region34: #{_lambda_.1} parent=1 // pred_check
      _
    $region35: #{_lambda_.1} parent=1 // pred_check_branch
      %74 = sbr.rel (0) target = $region37
    $region36: #{_lambda_.1} parent=1 // pred_region
      %75 = dma.done [#allocation9], 2048
    $region37: #{_lambda_.1} parent=1 // pred_fallthru
      _
    %v76 = vld [vmem:[%s0] sm:$0xff]
    %v77 = vld [vmem:[#allocation2] sm:$0xff]
    %v78 = vld [vmem:[#allocation2 + $0x8] sm:$0xff]
    %v79 = vld [vmem:[#allocation2 + $0x10] sm:$0xff]
    %v80 = vld [vmem:[#allocation2 + $0x18] sm:$0xff]
    %v81 = vld [vmem:[#allocation2 + $0x20] sm:$0xff]
    %v82 = vld [vmem:[#allocation2 + $0x28] sm:$0xff]
    %v83 = vld [vmem:[#allocation2 + $0x30] sm:$0xff]
    %v84 = vld [vmem:[#allocation2 + $0x38] sm:$0xff]
    %v85 = vld [vmem:[#allocation2 + $0x40] sm:$0xff]
    %v86 = vld [vmem:[#allocation2 + $0x48] sm:$0xff]
    %v87 = vld [vmem:[#allocation2 + $0x50] sm:$0xff]
    %v88 = vld [vmem:[#allocation2 + $0x58] sm:$0xff]
    %v89 = vld [vmem:[#allocation2 + $0x60] sm:$0xff]
    %v90 = vld [vmem:[#allocation2 + $0x68] sm:$0xff]
    %v91 = vld [vmem:[#allocation2 + $0x70] sm:$0xff]
    %v92 = vld [vmem:[#allocation2 + $0x78] sm:$0xff]
    %93 = vmatprep.subr.mxu0 0.0
    %94 = vmatpush1.msra.mxu0 %v77
    %95 = vmatprep.subr.mxu0 0.0
    %96 = vmatpush1.msra.mxu0 %v78
    %97 = vmatprep.subr.mxu0 0.0
    %98 = vmatpush1.msra.mxu0 %v79
    %99 = vmatprep.subr.mxu0 0.0
    %100 = vmatpush1.msra.mxu0 %v80
    %101 = vmatprep.subr.mxu0 0.0
    %102 = vmatpush1.msra.mxu0 %v81
    %103 = vmatprep.subr.mxu0 0.0
    %104 = vmatpush1.msra.mxu0 %v82
    %105 = vmatprep.subr.mxu0 0.0
    %106 = vmatpush1.msra.mxu0 %v83
    %107 = vmatprep.subr.mxu0 0.0
    %108 = vmatpush1.msra.mxu0 %v84
    %109 = vmatprep.subr.mxu0 0.0
    %110 = vmatpush1.msra.mxu0 %v85
    %111 = vmatprep.subr.mxu0 0.0
    %112 = vmatpush1.msra.mxu0 %v86
    %113 = vmatprep.subr.mxu0 0.0
    %114 = vmatpush1.msra.mxu0 %v87
    %115 = vmatprep.subr.mxu0 0.0
    %116 = vmatpush1.msra.mxu0 %v88
    %117 = vmatprep.subr.mxu0 0.0
    %118 = vmatpush1.msra.mxu0 %v89
    %119 = vmatprep.subr.mxu0 0.0
    %120 = vmatpush1.msra.mxu0 %v90
    %121 = vmatprep.subr.mxu0 0.0
    %122 = vmatpush1.msra.mxu0 %v91
    %123 = vmatprep.subr.mxu0 0.0
    %124 = vmatpush1.msra.mxu0 %v92
    %125 = vmatprep.subr.mxu0 0.0
    %126 = vmatpush1.msra.mxu0 0.0
    %127 = vmatprep.subr.mxu0 0.0
    %128 = vmatpush1.msra.mxu0 0.0
    %129 = vmatprep.subr.mxu0 0.0
    %130 = vmatpush1.msra.mxu0 0.0
    %131 = vmatprep.subr.mxu0 0.0
    %132 = vmatpush1.msra.mxu0 0.0
    %133 = vmatprep.subr.mxu0 0.0
    %134 = vmatpush1.msra.mxu0 0.0
    %135 = vmatprep.subr.mxu0 0.0
    %136 = vmatpush1.msra.mxu0 0.0
    %137 = vmatprep.subr.mxu0 0.0
    %138 = vmatpush1.msra.mxu0 0.0
    %139 = vmatprep.subr.mxu0 0.0
    %140 = vmatpush1.msra.mxu0 0.0
    %141 = vmatprep.subr.mxu0 0.0
    %142 = vmatpush1.msra.mxu0 0.0
    %143 = vmatprep.subr.mxu0 0.0
    %144 = vmatpush1.msra.mxu0 0.0
    %145 = vmatprep.subr.mxu0 0.0
    %146 = vmatpush1.msra.mxu0 0.0
    %147 = vmatprep.subr.mxu0 0.0
    %148 = vmatpush1.msra.mxu0 0.0
    %149 = vmatprep.subr.mxu0 0.0
    %150 = vmatpush1.msra.mxu0 0.0
    %151 = vmatprep.subr.mxu0 0.0
    %152 = vmatpush1.msra.mxu0 0.0
    %153 = vmatprep.subr.mxu0 0.0
    %154 = vmatpush1.msra.mxu0 0.0
    %155 = vmatprep.subr.mxu0 0.0
    %156 = vmatpush1.msra.mxu0 0.0
    %157 = vmatprep.mubr.f32.mxu0 0.0
    %158 = vmatmul.mubr.f32.gmra.mrb[0].mxu0 %v76
    %v159 = vpop.f32.mrb[0].mxu0
    %v160 = vadd.f32 0.0, %v159
    %v161 = vpop.f32.mrb[0].mxu0
    %162 = vdwg.mxu0
    %v163 = vmax.f32 %v160, 0.0
    %v164 = vld [vmem:[#allocation5] sm:$0xff]
    %v165 = vld [vmem:[#allocation5 + $0x8] sm:$0xff]
    %v166 = vld [vmem:[#allocation5 + $0x10] sm:$0xff]
    %v167 = vld [vmem:[#allocation5 + $0x18] sm:$0xff]
    %v168 = vld [vmem:[#allocation5 + $0x20] sm:$0xff]
    %v169 = vld [vmem:[#allocation5 + $0x28] sm:$0xff]
    %v170 = vld [vmem:[#allocation5 + $0x30] sm:$0xff]
    %v171 = vld [vmem:[#allocation5 + $0x38] sm:$0xff]
    %v172 = vld [vmem:[#allocation5 + $0x40] sm:$0xff]
    %v173 = vld [vmem:[#allocation5 + $0x48] sm:$0xff]
    %v174 = vld [vmem:[#allocation5 + $0x50] sm:$0xff]
    %v175 = vld [vmem:[#allocation5 + $0x58] sm:$0xff]
    %v176 = vld [vmem:[#allocation5 + $0x60] sm:$0xff]
    %v177 = vld [vmem:[#allocation5 + $0x68] sm:$0xff]
    %v178 = vld [vmem:[#allocation5 + $0x70] sm:$0xff]
    %v179 = vld [vmem:[#allocation5 + $0x78] sm:$0xff]
    %180 = vmatprep.subr.mxu0 0.0
    %181 = vmatpush1.msra.mxu0 %v164
    %182 = vmatprep.subr.mxu0 0.0
    %183 = vmatpush1.msra.mxu0 %v165
    %184 = vmatprep.subr.mxu0 0.0
    %185 = vmatpush1.msra.mxu0 %v166
    %186 = vmatprep.subr.mxu0 0.0
    %187 = vmatpush1.msra.mxu0 %v167
    %188 = vmatprep.subr.mxu0 0.0
    %189 = vmatpush1.msra.mxu0 %v168
    %190 = vmatprep.subr.mxu0 0.0
    %191 = vmatpush1.msra.mxu0 %v169
    %192 = vmatprep.subr.mxu0 0.0
    %193 = vmatpush1.msra.mxu0 %v170
    %194 = vmatprep.subr.mxu0 0.0
    %195 = vmatpush1.msra.mxu0 %v171
    %196 = vmatprep.subr.mxu0 0.0
    %197 = vmatpush1.msra.mxu0 %v172
    %198 = vmatprep.subr.mxu0 0.0
    %199 = vmatpush1.msra.mxu0 %v173
    %200 = vmatprep.subr.mxu0 0.0
    %201 = vmatpush1.msra.mxu0 %v174
    %202 = vmatprep.subr.mxu0 0.0
    %203 = vmatpush1.msra.mxu0 %v175
    %204 = vmatprep.subr.mxu0 0.0
    %205 = vmatpush1.msra.mxu0 %v176
    %206 = vmatprep.subr.mxu0 0.0
    %207 = vmatpush1.msra.mxu0 %v177
    %208 = vmatprep.subr.mxu0 0.0
    %209 = vmatpush1.msra.mxu0 %v178
    %210 = vmatprep.subr.mxu0 0.0
    %211 = vmatpush1.msra.mxu0 %v179
    %212 = vmatprep.subr.mxu0 0.0
    %213 = vmatpush1.msra.mxu0 0.0
    %214 = vmatprep.subr.mxu0 0.0
    %215 = vmatpush1.msra.mxu0 0.0
    %216 = vmatprep.subr.mxu0 0.0
    %217 = vmatpush1.msra.mxu0 0.0
    %218 = vmatprep.subr.mxu0 0.0
    %219 = vmatpush1.msra.mxu0 0.0
    %220 = vmatprep.subr.mxu0 0.0
    %221 = vmatpush1.msra.mxu0 0.0
    %222 = vmatprep.subr.mxu0 0.0
    %223 = vmatpush1.msra.mxu0 0.0
    %224 = vmatprep.subr.mxu0 0.0
    %225 = vmatpush1.msra.mxu0 0.0
    %226 = vmatprep.subr.mxu0 0.0
    %227 = vmatpush1.msra.mxu0 0.0
    %228 = vmatprep.subr.mxu0 0.0
    %229 = vmatpush1.msra.mxu0 0.0
    %230 = vmatprep.subr.mxu0 0.0
    %231 = vmatpush1.msra.mxu0 0.0
    %232 = vmatprep.subr.mxu0 0.0
    %233 = vmatpush1.msra.mxu0 0.0
    %234 = vmatprep.subr.mxu0 0.0
    %235 = vmatpush1.msra.mxu0 0.0
    %236 = vmatprep.subr.mxu0 0.0
    %237 = vmatpush1.msra.mxu0 0.0
    %238 = vmatprep.subr.mxu0 0.0
    %239 = vmatpush1.msra.mxu0 0.0
    %240 = vmatprep.subr.mxu0 0.0
    %241 = vmatpush1.msra.mxu0 0.0
    %242 = vmatprep.subr.mxu0 0.0
    %243 = vmatpush1.msra.mxu0 0.0
    %244 = vmatprep.mubr.f32.mxu0 0.0
    %245 = vmatmul.mubr.f32.gmra.mrb[0].mxu0 %v163
    %v246 = vpop.f32.mrb[0].mxu0
    %v247 = vadd.f32 0.0, %v246
    %v248 = vpop.f32.mrb[0].mxu0
    %249 = vdwg.mxu0
    %v250 = vmax.f32 %v247, 0.0
    %v251 = vld [vmem:[#allocation7] sm:$0xff]
    %v252 = vld [vmem:[#allocation7 + $0x8] sm:$0xff]
    %v253 = vld [vmem:[#allocation7 + $0x10] sm:$0xff]
    %v254 = vld [vmem:[#allocation7 + $0x18] sm:$0xff]
    %v255 = vld [vmem:[#allocation7 + $0x20] sm:$0xff]
    %v256 = vld [vmem:[#allocation7 + $0x28] sm:$0xff]
    %v257 = vld [vmem:[#allocation7 + $0x30] sm:$0xff]
    %v258 = vld [vmem:[#allocation7 + $0x38] sm:$0xff]
    %v259 = vld [vmem:[#allocation7 + $0x40] sm:$0xff]
    %v260 = vld [vmem:[#allocation7 + $0x48] sm:$0xff]
    %v261 = vld [vmem:[#allocation7 + $0x50] sm:$0xff]
    %v262 = vld [vmem:[#allocation7 + $0x58] sm:$0xff]
    %v263 = vld [vmem:[#allocation7 + $0x60] sm:$0xff]
    %v264 = vld [vmem:[#allocation7 + $0x68] sm:$0xff]
    %v265 = vld [vmem:[#allocation7 + $0x70] sm:$0xff]
    %v266 = vld [vmem:[#allocation7 + $0x78] sm:$0xff]
    %267 = vmatprep.subr.mxu0 0.0
    %268 = vmatpush1.msra.mxu0 %v251
    %269 = vmatprep.subr.mxu0 0.0
    %270 = vmatpush1.msra.mxu0 %v252
    %271 = vmatprep.subr.mxu0 0.0
    %272 = vmatpush1.msra.mxu0 %v253
    %273 = vmatprep.subr.mxu0 0.0
    %274 = vmatpush1.msra.mxu0 %v254
    %275 = vmatprep.subr.mxu0 0.0
    %276 = vmatpush1.msra.mxu0 %v255
    %277 = vmatprep.subr.mxu0 0.0
    %278 = vmatpush1.msra.mxu0 %v256
    %279 = vmatprep.subr.mxu0 0.0
    %280 = vmatpush1.msra.mxu0 %v257
    %281 = vmatprep.subr.mxu0 0.0
    %282 = vmatpush1.msra.mxu0 %v258
    %283 = vmatprep.subr.mxu0 0.0
    %284 = vmatpush1.msra.mxu0 %v259
    %285 = vmatprep.subr.mxu0 0.0
    %286 = vmatpush1.msra.mxu0 %v260
    %287 = vmatprep.subr.mxu0 0.0
    %288 = vmatpush1.msra.mxu0 %v261
    %289 = vmatprep.subr.mxu0 0.0
    %290 = vmatpush1.msra.mxu0 %v262
    %291 = vmatprep.subr.mxu0 0.0
    %292 = vmatpush1.msra.mxu0 %v263
    %293 = vmatprep.subr.mxu0 0.0
    %294 = vmatpush1.msra.mxu0 %v264
    %295 = vmatprep.subr.mxu0 0.0
    %296 = vmatpush1.msra.mxu0 %v265
    %297 = vmatprep.subr.mxu0 0.0
    %298 = vmatpush1.msra.mxu0 %v266
    %299 = vmatprep.subr.mxu0 0.0
    %300 = vmatpush1.msra.mxu0 0.0
    %301 = vmatprep.subr.mxu0 0.0
    %302 = vmatpush1.msra.mxu0 0.0
    %303 = vmatprep.subr.mxu0 0.0
    %304 = vmatpush1.msra.mxu0 0.0
    %305 = vmatprep.subr.mxu0 0.0
    %306 = vmatpush1.msra.mxu0 0.0
    %307 = vmatprep.subr.mxu0 0.0
    %308 = vmatpush1.msra.mxu0 0.0
    %309 = vmatprep.subr.mxu0 0.0
    %310 = vmatpush1.msra.mxu0 0.0
    %311 = vmatprep.subr.mxu0 0.0
    %312 = vmatpush1.msra.mxu0 0.0
    %313 = vmatprep.subr.mxu0 0.0
    %314 = vmatpush1.msra.mxu0 0.0
    %315 = vmatprep.subr.mxu0 0.0
    %316 = vmatpush1.msra.mxu0 0.0
    %317 = vmatprep.subr.mxu0 0.0
    %318 = vmatpush1.msra.mxu0 0.0
    %319 = vmatprep.subr.mxu0 0.0
    %320 = vmatpush1.msra.mxu0 0.0
    %321 = vmatprep.subr.mxu0 0.0
    %322 = vmatpush1.msra.mxu0 0.0
    %323 = vmatprep.subr.mxu0 0.0
    %324 = vmatpush1.msra.mxu0 0.0
    %325 = vmatprep.subr.mxu0 0.0
    %326 = vmatpush1.msra.mxu0 0.0
    %327 = vmatprep.subr.mxu0 0.0
    %328 = vmatpush1.msra.mxu0 0.0
    %329 = vmatprep.subr.mxu0 0.0
    %330 = vmatpush1.msra.mxu0 0.0
    %331 = vmatprep.mubr.f32.mxu0 0.0
    %332 = vmatmul.mubr.f32.gmra.mrb[0].mxu0 %v250
    %v333 = vpop.f32.mrb[0].mxu0
    %v334 = vadd.f32 0.0, %v333
    %v335 = vpop.f32.mrb[0].mxu0
    %336 = vdwg.mxu0
    %v337 = vmax.f32 %v334, 0.0
    %v338 = vld [vmem:[#allocation8] sm:$0xff]
    %v339 = vld [vmem:[#allocation8 + $0x8] sm:$0xff]
    %v340 = vld [vmem:[#allocation8 + $0x10] sm:$0xff]
    %v341 = vld [vmem:[#allocation8 + $0x18] sm:$0xff]
    %v342 = vld [vmem:[#allocation8 + $0x20] sm:$0xff]
    %v343 = vld [vmem:[#allocation8 + $0x28] sm:$0xff]
    %v344 = vld [vmem:[#allocation8 + $0x30] sm:$0xff]
    %v345 = vld [vmem:[#allocation8 + $0x38] sm:$0xff]
    %v346 = vld [vmem:[#allocation8 + $0x40] sm:$0xff]
    %v347 = vld [vmem:[#allocation8 + $0x48] sm:$0xff]
    %v348 = vld [vmem:[#allocation8 + $0x50] sm:$0xff]
    %v349 = vld [vmem:[#allocation8 + $0x58] sm:$0xff]
    %v350 = vld [vmem:[#allocation8 + $0x60] sm:$0xff]
    %v351 = vld [vmem:[#allocation8 + $0x68] sm:$0xff]
    %v352 = vld [vmem:[#allocation8 + $0x70] sm:$0xff]
    %v353 = vld [vmem:[#allocation8 + $0x78] sm:$0xff]
    %354 = vmatprep.subr.mxu0 0.0
    %355 = vmatpush1.msra.mxu0 %v338
    %356 = vmatprep.subr.mxu0 0.0
    %357 = vmatpush1.msra.mxu0 %v339
    %358 = vmatprep.subr.mxu0 0.0
    %359 = vmatpush1.msra.mxu0 %v340
    %360 = vmatprep.subr.mxu0 0.0
    %361 = vmatpush1.msra.mxu0 %v341
    %362 = vmatprep.subr.mxu0 0.0
    %363 = vmatpush1.msra.mxu0 %v342
    %364 = vmatprep.subr.mxu0 0.0
    %365 = vmatpush1.msra.mxu0 %v343
    %366 = vmatprep.subr.mxu0 0.0
    %367 = vmatpush1.msra.mxu0 %v344
    %368 = vmatprep.subr.mxu0 0.0
    %369 = vmatpush1.msra.mxu0 %v345
    %370 = vmatprep.subr.mxu0 0.0
    %371 = vmatpush1.msra.mxu0 %v346
    %372 = vmatprep.subr.mxu0 0.0
    %373 = vmatpush1.msra.mxu0 %v347
    %374 = vmatprep.subr.mxu0 0.0
    %375 = vmatpush1.msra.mxu0 %v348
    %376 = vmatprep.subr.mxu0 0.0
    %377 = vmatpush1.msra.mxu0 %v349
    %378 = vmatprep.subr.mxu0 0.0
    %379 = vmatpush1.msra.mxu0 %v350
    %380 = vmatprep.subr.mxu0 0.0
    %381 = vmatpush1.msra.mxu0 %v351
    %382 = vmatprep.subr.mxu0 0.0
    %383 = vmatpush1.msra.mxu0 %v352
    %384 = vmatprep.subr.mxu0 0.0
    %385 = vmatpush1.msra.mxu0 %v353
    %386 = vmatprep.subr.mxu0 0.0
    %387 = vmatpush1.msra.mxu0 0.0
    %388 = vmatprep.subr.mxu0 0.0
    %389 = vmatpush1.msra.mxu0 0.0
    %390 = vmatprep.subr.mxu0 0.0
    %391 = vmatpush1.msra.mxu0 0.0
    %392 = vmatprep.subr.mxu0 0.0
    %393 = vmatpush1.msra.mxu0 0.0
    %394 = vmatprep.subr.mxu0 0.0
    %395 = vmatpush1.msra.mxu0 0.0
    %396 = vmatprep.subr.mxu0 0.0
    %397 = vmatpush1.msra.mxu0 0.0
    %398 = vmatprep.subr.mxu0 0.0
    %399 = vmatpush1.msra.mxu0 0.0
    %400 = vmatprep.subr.mxu0 0.0
    %401 = vmatpush1.msra.mxu0 0.0
    %402 = vmatprep.subr.mxu0 0.0
    %403 = vmatpush1.msra.mxu0 0.0
    %404 = vmatprep.subr.mxu0 0.0
    %405 = vmatpush1.msra.mxu0 0.0
    %406 = vmatprep.subr.mxu0 0.0
    %407 = vmatpush1.msra.mxu0 0.0
    %408 = vmatprep.subr.mxu0 0.0
    %409 = vmatpush1.msra.mxu0 0.0
    %410 = vmatprep.subr.mxu0 0.0
    %411 = vmatpush1.msra.mxu0 0.0
    %412 = vmatprep.subr.mxu0 0.0
    %413 = vmatpush1.msra.mxu0 0.0
    %414 = vmatprep.subr.mxu0 0.0
    %415 = vmatpush1.msra.mxu0 0.0
    %416 = vmatprep.subr.mxu0 0.0
    %417 = vmatpush1.msra.mxu0 0.0
    %418 = vmatprep.mubr.f32.mxu0 0.0
    %419 = vmatmul.mubr.f32.gmra.mrb[0].mxu0 %v337
    %v420 = vpop.f32.mrb[0].mxu0
    %v421 = vadd.f32 0.0, %v420
    %v422 = vpop.f32.mrb[0].mxu0
    %423 = vdwg.mxu0
    %424 = vmax.xlane.f32.xlu0 %v421
    %v425 = vpop.xlane.xlu0 %424
    %v426 = vsub.f32 %v421, %v425
    %v427 = vmul.f32 %v426, 1.442695
    %v428 = vpow.pop %v427
    %429 = vadd.xlane.f32.xlu0 %v428
    %v430 = vpop.xlane.xlu0 %429
    %v431 = vlog2.pop %v430
    %v432 = vmul.f32 %v431, 0.6931472
    %v433 = vsub.f32 %v426, %v432
    %434 = vst [vmem:[#allocation10] sm:$0xff] %v433
    // Predicated region
    $region38: #{_lambda_.1} parent=1 // pred_check
      _
    $region39: #{_lambda_.1} parent=1 // pred_check_branch
      %436 = sbr.rel (0) target = $region41
    $region40: #{_lambda_.1} parent=1 // pred_region
      %s438 = ssub.s32 128, 128
      %439 = vsyncadd [#allocation4], %s438
      %s441 = sshll.u32 [#allocation10], 4
      %s442 = int_to_ptr.vmem [resolvable:$true] %s441
      %444 = dma.vmem_to_hbm [thread:$0]  %s442, 128, %s5, [#allocation4]
    $region41: #{_lambda_.1} parent=1 // pred_fallthru
      _
    // Predicated region
    $region42: #{_lambda_.1} parent=1 // pred_check
      _
    $region43: #{_lambda_.1} parent=1 // pred_check_branch
      %446 = sbr.rel (0) target = $region45
    $region44: #{_lambda_.1} parent=1 // pred_region
      %447 = dma.done [#allocation4], 128
    $region45: #{_lambda_.1} parent=1 // pred_fallthru
      _
    %448 = vsyncpa [#allocation3], 1
    %449 = vsyncpa [#allocation6], 1
    %450 = vsyncpa [#allocation9], 1
    %451 = vsyncpa [#allocation4], 1

</llo_original>
